<compile_context>
chip_gen: v7x
topology: tpu7x:2x2x1
jax: 0.10.0
libtpu: 0.0.40
codegen_flags: <defaults>
</compile_context>

<pallas_src>
import functools

import jax
import jax.numpy as jnp
from jax.experimental import pallas as pl
from jax.experimental.pallas import tpu as pltpu


# --- packed-parameter layout (flat f32 vector living in SMEM) -----------------
# Weights stored (in_features, out_features) row-major:
#   y[j] = sum_i w[i, j] * x[i] + b[j]   ==   PyTorch  x @ W.T + b
# NOTE: PyTorch nn.Linear stores weight as (out, in); transpose before packing
# if importing a real state_dict.
_W1, _B1 = 0, 12           # w1: (3, 4), b1: (4,)
_W2, _B2 = 16, 28          # w2: (4, 3), b2: (3,)
_W3, _B3 = 31, 37          # w3: (3, 2) pre-scaled by 0.5, b3: (2,) pre-scaled by 0.5
_THETA_LEN = 39

_LANES = 128               # lane width (last dim of every block)
_MAX_R_TILE = 2048         # sublane rows per tile cap: 2*(3+2)*R*128*4 B ~ 10.5 MiB
                           # double-buffered -> fits v5e 16 MiB scoped / v7x 64 MiB VMEM


def mlp_kernel(theta_ref, x_ref, o_ref):
    # theta_ref: (39,)            f32 in SMEM (scalar weights/biases)
    # x_ref:     (3, R_TILE, 128) f32 in VMEM -- batch on (sublane, lane) axes
    # o_ref:     (2, R_TILE, 128) f32 in VMEM
    x0 = x_ref[0]                                     # (R_TILE, 128) full vregs
    x1 = x_ref[1]
    x2 = x_ref[2]

    # fc1 (3 -> 4) + ReLU : unrolled VPU multiply-adds with SMEM scalar weights
    h1 = []
    for j in range(4):
        acc = theta_ref[_W1 + 0 * 4 + j] * x0
        acc = acc + theta_ref[_W1 + 1 * 4 + j] * x1
        acc = acc + theta_ref[_W1 + 2 * 4 + j] * x2
        h1.append(jnp.maximum(acc + theta_ref[_B1 + j], 0.0))

    # fc2 (4 -> 3) + Tanh
    h2 = []
    for k in range(3):
        acc = theta_ref[_W2 + 0 * 3 + k] * h1[0]
        for j in range(1, 4):
            acc = acc + theta_ref[_W2 + j * 3 + k] * h1[j]
        h2.append(jnp.tanh(acc + theta_ref[_B2 + k]))

    # fc3 (3 -> 2) + Sigmoid.  w3/b3 are pre-scaled by 0.5 at pack time, so
    # sigmoid(z) = 0.5*tanh(0.5*z) + 0.5 = 0.5*tanh(z') + 0.5  (one EUP push,
    # no extra in-kernel multiply).  Direct per-row lane-dense stores.
    for m in range(2):
        acc = theta_ref[_W3 + 0 * 2 + m] * h2[0]
        for k in range(1, 3):
            acc = acc + theta_ref[_W3 + k * 2 + m] * h2[k]
        o_ref[m] = 0.5 * jnp.tanh(acc + theta_ref[_B3 + m]) + 0.5


def pack_params(params):
    """Pack all weights/biases into one flat f32 vector; fold the 0.5 sigmoid
    pre-scale into the last layer (host-side constant folding)."""
    theta = jnp.concatenate([
        params["w1"].reshape(-1), params["b1"].reshape(-1),
        params["w2"].reshape(-1), params["b2"].reshape(-1),
        (0.5 * params["w3"]).reshape(-1), (0.5 * params["b3"]).reshape(-1),
    ]).astype(jnp.float32)
    assert theta.shape == (_THETA_LEN,)
    return theta


def _round_up(x, m):
    return (x + m - 1) // m * m


def custom_net_forward(x, params, *, r_tile=1024):
    """x: (B, 3) float32 -> (B, 2) float32."""
    x = x.astype(jnp.float32)
    B = x.shape[0]
    theta = pack_params(params)

    # --- batch tiling: batch lives on (sublane_rows, 128 lanes) ---------------
    rows_needed = _round_up(max(B, 1), _LANES) // _LANES        # sublane rows of data
    r_tile = int(min(max(r_tile // 8, 1) * 8, _MAX_R_TILE))     # multiple of 8, capped
    r_tile = min(r_tile, _round_up(rows_needed, 8))
    # Prefer >= 2 grid steps when there is enough work so v7x's two TensorCores
    # both get batch tiles (no effect on single-TC v5e/v6e).
    if rows_needed >= 16 and rows_needed <= r_tile:
        r_tile = _round_up(rows_needed, 16) // 2
    rows_total = _round_up(rows_needed, r_tile)
    num_tiles = rows_total // r_tile
    b_pad = rows_total * _LANES

    # feature-major, zero-padded tail, (3, rows, 128) sublane/lane packing
    xt = jnp.pad(x.T, ((0, 0), (0, b_pad - B))).reshape(3, rows_total, _LANES)

    out = pl.pallas_call(
        mlp_kernel,
        out_shape=jax.ShapeDtypeStruct((2, rows_total, _LANES), jnp.float32),
        grid=(num_tiles,),
        in_specs=[
            # packed weights/biases: whole tiny vector resident in SMEM
            pl.BlockSpec(memory_space=pltpu.MemorySpace.SMEM),
            # sublane/lane-dense batch tile of the input
            pl.BlockSpec((3, r_tile, _LANES), lambda i: (0, i, 0)),
        ],
        out_specs=pl.BlockSpec((2, r_tile, _LANES), lambda i: (0, i, 0)),
        compiler_params=pltpu.CompilerParams(
            dimension_semantics=("parallel",)),
        cost_estimate=pl.CostEstimate(
            flops=75 * b_pad,              # ~60 MAC flops + bias/activation adds
            transcendentals=5 * b_pad,     # 3 tanh + 2 tanh-as-sigmoid per element
            bytes_accessed=20 * b_pad),    # (3 in + 2 out) * 4 bytes per element
    )(theta, xt)

    return out.reshape(2, b_pad)[:, :B].T            # back to (B, 2)


def init_params(key):
    """Deterministic init mimicking nn.Linear default (uniform +-1/sqrt(fan_in)).
    Stored as (in_features, out_features) == transpose of PyTorch's layout."""
    ks = jax.random.split(key, 6)

    def linear(kw, kb, fan_in, fan_out):
        bound = 1.0 / jnp.sqrt(fan_in)
        w = jax.random.uniform(kw, (fan_in, fan_out), jnp.float32, -bound, bound)
        b = jax.random.uniform(kb, (fan_out,), jnp.float32, -bound, bound)
        return w, b

    w1, b1 = linear(ks[0], ks[1], 3, 4)
    w2, b2 = linear(ks[2], ks[3], 4, 3)
    w3, b3 = linear(ks[4], ks[5], 3, 2)
    return {"w1": w1, "b1": b1, "w2": w2, "b2": b2, "w3": w3, "b3": b3}


def reference_forward(x, params):
    h1 = jnp.maximum(x @ params["w1"] + params["b1"], 0.0)
    h2 = jnp.tanh(h1 @ params["w2"] + params["b2"])
    return jax.nn.sigmoid(h2 @ params["w3"] + params["b3"])


if __name__ == "__main__":
    key = jax.random.PRNGKey(0)
    k_params, k_x1, k_x2 = jax.random.split(key, 3)
    params = init_params(k_params)

    # keep pad/transpose/kernel/slice under one jit so layout plumbing fuses
    fwd = jax.jit(functools.partial(custom_net_forward, params=params))

    # small primary check
    B1 = 8
    x1 = jax.random.normal(k_x1, (B1, 3), dtype=jnp.float32)
    out1 = jax.block_until_ready(fwd(x1))
    ref1 = reference_forward(x1, params)
    assert out1.shape == (B1, 2), out1.shape
    assert jnp.allclose(out1, ref1, atol=1e-5, rtol=1e-5), (out1, ref1)

    # non-multiple-of-128 batch exercises the pad / slice path
    B2 = 300
    x2 = jax.random.normal(k_x2, (B2, 3), dtype=jnp.float32)
    out2 = jax.block_until_ready(fwd(x2))
    ref2 = reference_forward(x2, params)
    assert out2.shape == (B2, 2), out2.shape
    assert jnp.allclose(out2, ref2, atol=1e-5, rtol=1e-5)

    print("KERNEL_OK")
</pallas_src>

<mosaic_0001>
module attributes {stable_mosaic.version = 11 : i64} {
  func.func @mlp_kernel(%arg0: i32, %arg1: memref<39xf32, #tpu.memory_space<smem>>, %arg2: memref<3x8x128xf32, #tpu.memory_space<vmem>>, %arg3: memref<2x8x128xf32, #tpu.memory_space<vmem>>) attributes {dimension_semantics = [#tpu.dimension_semantics<parallel>], iteration_bounds = array<i64: 1>, scalar_prefetch = 0 : i64, scratch_operands = 0 : i64, tpu.core_type = #tpu.core_type<tc>, window_params = [{transform_indices = @transform_0, window_bounds = array<i64: 39>}, {transform_indices = @transform_1, window_bounds = array<i64: 3, 8, 128>}, {transform_indices = @transform_2, window_bounds = array<i64: 2, 8, 128>}]} {
    %c0 = arith.constant 0 : index
    %c0_0 = arith.constant 0 : index
    %c0_1 = arith.constant 0 : index
    %0 = vector.load %arg2[%c0, %c0_0, %c0_1] : memref<3x8x128xf32, #tpu.memory_space<vmem>>, vector<1x8x128xf32>
    %1 = vector.shape_cast %0 : vector<1x8x128xf32> to vector<8x128xf32>
    %c1 = arith.constant 1 : index
    %c0_2 = arith.constant 0 : index
    %c0_3 = arith.constant 0 : index
    %2 = vector.load %arg2[%c1, %c0_2, %c0_3] : memref<3x8x128xf32, #tpu.memory_space<vmem>>, vector<1x8x128xf32>
    %3 = vector.shape_cast %2 : vector<1x8x128xf32> to vector<8x128xf32>
    %c2 = arith.constant 2 : index
    %c0_4 = arith.constant 0 : index
    %c0_5 = arith.constant 0 : index
    %4 = vector.load %arg2[%c2, %c0_4, %c0_5] : memref<3x8x128xf32, #tpu.memory_space<vmem>>, vector<1x8x128xf32>
    %5 = vector.shape_cast %4 : vector<1x8x128xf32> to vector<8x128xf32>
    %c0_6 = arith.constant 0 : index
    %6 = memref.load %arg1[%c0_6] : memref<39xf32, #tpu.memory_space<smem>>
    %7 = vector.broadcast %6 : f32 to vector<8x128xf32>
    %8 = arith.mulf %7, %1 : vector<8x128xf32>
    %c4 = arith.constant 4 : index
    %9 = memref.load %arg1[%c4] : memref<39xf32, #tpu.memory_space<smem>>
    %10 = vector.broadcast %9 : f32 to vector<8x128xf32>
    %11 = arith.mulf %10, %3 : vector<8x128xf32>
    %12 = arith.addf %8, %11 : vector<8x128xf32>
    %c8 = arith.constant 8 : index
    %13 = memref.load %arg1[%c8] : memref<39xf32, #tpu.memory_space<smem>>
    %14 = vector.broadcast %13 : f32 to vector<8x128xf32>
    %15 = arith.mulf %14, %5 : vector<8x128xf32>
    %16 = arith.addf %12, %15 : vector<8x128xf32>
    %c12 = arith.constant 12 : index
    %17 = memref.load %arg1[%c12] : memref<39xf32, #tpu.memory_space<smem>>
    %18 = vector.broadcast %17 : f32 to vector<8x128xf32>
    %19 = arith.addf %16, %18 : vector<8x128xf32>
    %cst = arith.constant 0.000000e+00 : f32
    %20 = vector.broadcast %cst : f32 to vector<8x128xf32>
    %21 = arith.maximumf %19, %20 : vector<8x128xf32>
    %c1_7 = arith.constant 1 : index
    %22 = memref.load %arg1[%c1_7] : memref<39xf32, #tpu.memory_space<smem>>
    %23 = vector.broadcast %22 : f32 to vector<8x128xf32>
    %24 = arith.mulf %23, %1 : vector<8x128xf32>
    %c5 = arith.constant 5 : index
    %25 = memref.load %arg1[%c5] : memref<39xf32, #tpu.memory_space<smem>>
    %26 = vector.broadcast %25 : f32 to vector<8x128xf32>
    %27 = arith.mulf %26, %3 : vector<8x128xf32>
    %28 = arith.addf %24, %27 : vector<8x128xf32>
    %c9 = arith.constant 9 : index
    %29 = memref.load %arg1[%c9] : memref<39xf32, #tpu.memory_space<smem>>
    %30 = vector.broadcast %29 : f32 to vector<8x128xf32>
    %31 = arith.mulf %30, %5 : vector<8x128xf32>
    %32 = arith.addf %28, %31 : vector<8x128xf32>
    %c13 = arith.constant 13 : index
    %33 = memref.load %arg1[%c13] : memref<39xf32, #tpu.memory_space<smem>>
    %34 = vector.broadcast %33 : f32 to vector<8x128xf32>
    %35 = arith.addf %32, %34 : vector<8x128xf32>
    %cst_8 = arith.constant 0.000000e+00 : f32
    %36 = vector.broadcast %cst_8 : f32 to vector<8x128xf32>
    %37 = arith.maximumf %35, %36 : vector<8x128xf32>
    %c2_9 = arith.constant 2 : index
    %38 = memref.load %arg1[%c2_9] : memref<39xf32, #tpu.memory_space<smem>>
    %39 = vector.broadcast %38 : f32 to vector<8x128xf32>
    %40 = arith.mulf %39, %1 : vector<8x128xf32>
    %c6 = arith.constant 6 : index
    %41 = memref.load %arg1[%c6] : memref<39xf32, #tpu.memory_space<smem>>
    %42 = vector.broadcast %41 : f32 to vector<8x128xf32>
    %43 = arith.mulf %42, %3 : vector<8x128xf32>
    %44 = arith.addf %40, %43 : vector<8x128xf32>
    %c10 = arith.constant 10 : index
    %45 = memref.load %arg1[%c10] : memref<39xf32, #tpu.memory_space<smem>>
    %46 = vector.broadcast %45 : f32 to vector<8x128xf32>
    %47 = arith.mulf %46, %5 : vector<8x128xf32>
    %48 = arith.addf %44, %47 : vector<8x128xf32>
    %c14 = arith.constant 14 : index
    %49 = memref.load %arg1[%c14] : memref<39xf32, #tpu.memory_space<smem>>
    %50 = vector.broadcast %49 : f32 to vector<8x128xf32>
    %51 = arith.addf %48, %50 : vector<8x128xf32>
    %cst_10 = arith.constant 0.000000e+00 : f32
    %52 = vector.broadcast %cst_10 : f32 to vector<8x128xf32>
    %53 = arith.maximumf %51, %52 : vector<8x128xf32>
    %c3 = arith.constant 3 : index
    %54 = memref.load %arg1[%c3] : memref<39xf32, #tpu.memory_space<smem>>
    %55 = vector.broadcast %54 : f32 to vector<8x128xf32>
    %56 = arith.mulf %55, %1 : vector<8x128xf32>
    %c7 = arith.constant 7 : index
    %57 = memref.load %arg1[%c7] : memref<39xf32, #tpu.memory_space<smem>>
    %58 = vector.broadcast %57 : f32 to vector<8x128xf32>
    %59 = arith.mulf %58, %3 : vector<8x128xf32>
    %60 = arith.addf %56, %59 : vector<8x128xf32>
    %c11 = arith.constant 11 : index
    %61 = memref.load %arg1[%c11] : memref<39xf32, #tpu.memory_space<smem>>
    %62 = vector.broadcast %61 : f32 to vector<8x128xf32>
    %63 = arith.mulf %62, %5 : vector<8x128xf32>
    %64 = arith.addf %60, %63 : vector<8x128xf32>
    %c15 = arith.constant 15 : index
    %65 = memref.load %arg1[%c15] : memref<39xf32, #tpu.memory_space<smem>>
    %66 = vector.broadcast %65 : f32 to vector<8x128xf32>
    %67 = arith.addf %64, %66 : vector<8x128xf32>
    %cst_11 = arith.constant 0.000000e+00 : f32
    %68 = vector.broadcast %cst_11 : f32 to vector<8x128xf32>
    %69 = arith.maximumf %67, %68 : vector<8x128xf32>
    %c16 = arith.constant 16 : index
    %70 = memref.load %arg1[%c16] : memref<39xf32, #tpu.memory_space<smem>>
    %71 = vector.broadcast %70 : f32 to vector<8x128xf32>
    %72 = arith.mulf %71, %21 : vector<8x128xf32>
    %c19 = arith.constant 19 : index
    %73 = memref.load %arg1[%c19] : memref<39xf32, #tpu.memory_space<smem>>
    %74 = vector.broadcast %73 : f32 to vector<8x128xf32>
    %75 = arith.mulf %74, %37 : vector<8x128xf32>
    %76 = arith.addf %72, %75 : vector<8x128xf32>
    %c22 = arith.constant 22 : index
    %77 = memref.load %arg1[%c22] : memref<39xf32, #tpu.memory_space<smem>>
    %78 = vector.broadcast %77 : f32 to vector<8x128xf32>
    %79 = arith.mulf %78, %53 : vector<8x128xf32>
    %80 = arith.addf %76, %79 : vector<8x128xf32>
    %c25 = arith.constant 25 : index
    %81 = memref.load %arg1[%c25] : memref<39xf32, #tpu.memory_space<smem>>
    %82 = vector.broadcast %81 : f32 to vector<8x128xf32>
    %83 = arith.mulf %82, %69 : vector<8x128xf32>
    %84 = arith.addf %80, %83 : vector<8x128xf32>
    %c28 = arith.constant 28 : index
    %85 = memref.load %arg1[%c28] : memref<39xf32, #tpu.memory_space<smem>>
    %86 = vector.broadcast %85 : f32 to vector<8x128xf32>
    %87 = arith.addf %84, %86 : vector<8x128xf32>
    %88 = math.tanh %87 : vector<8x128xf32>
    %c17 = arith.constant 17 : index
    %89 = memref.load %arg1[%c17] : memref<39xf32, #tpu.memory_space<smem>>
    %90 = vector.broadcast %89 : f32 to vector<8x128xf32>
    %91 = arith.mulf %90, %21 : vector<8x128xf32>
    %c20 = arith.constant 20 : index
    %92 = memref.load %arg1[%c20] : memref<39xf32, #tpu.memory_space<smem>>
    %93 = vector.broadcast %92 : f32 to vector<8x128xf32>
    %94 = arith.mulf %93, %37 : vector<8x128xf32>
    %95 = arith.addf %91, %94 : vector<8x128xf32>
    %c23 = arith.constant 23 : index
    %96 = memref.load %arg1[%c23] : memref<39xf32, #tpu.memory_space<smem>>
    %97 = vector.broadcast %96 : f32 to vector<8x128xf32>
    %98 = arith.mulf %97, %53 : vector<8x128xf32>
    %99 = arith.addf %95, %98 : vector<8x128xf32>
    %c26 = arith.constant 26 : index
    %100 = memref.load %arg1[%c26] : memref<39xf32, #tpu.memory_space<smem>>
    %101 = vector.broadcast %100 : f32 to vector<8x128xf32>
    %102 = arith.mulf %101, %69 : vector<8x128xf32>
    %103 = arith.addf %99, %102 : vector<8x128xf32>
    %c29 = arith.constant 29 : index
    %104 = memref.load %arg1[%c29] : memref<39xf32, #tpu.memory_space<smem>>
    %105 = vector.broadcast %104 : f32 to vector<8x128xf32>
    %106 = arith.addf %103, %105 : vector<8x128xf32>
    %107 = math.tanh %106 : vector<8x128xf32>
    %c18 = arith.constant 18 : index
    %108 = memref.load %arg1[%c18] : memref<39xf32, #tpu.memory_space<smem>>
    %109 = vector.broadcast %108 : f32 to vector<8x128xf32>
    %110 = arith.mulf %109, %21 : vector<8x128xf32>
    %c21 = arith.constant 21 : index
    %111 = memref.load %arg1[%c21] : memref<39xf32, #tpu.memory_space<smem>>
    %112 = vector.broadcast %111 : f32 to vector<8x128xf32>
    %113 = arith.mulf %112, %37 : vector<8x128xf32>
    %114 = arith.addf %110, %113 : vector<8x128xf32>
    %c24 = arith.constant 24 : index
    %115 = memref.load %arg1[%c24] : memref<39xf32, #tpu.memory_space<smem>>
    %116 = vector.broadcast %115 : f32 to vector<8x128xf32>
    %117 = arith.mulf %116, %53 : vector<8x128xf32>
    %118 = arith.addf %114, %117 : vector<8x128xf32>
    %c27 = arith.constant 27 : index
    %119 = memref.load %arg1[%c27] : memref<39xf32, #tpu.memory_space<smem>>
    %120 = vector.broadcast %119 : f32 to vector<8x128xf32>
    %121 = arith.mulf %120, %69 : vector<8x128xf32>
    %122 = arith.addf %118, %121 : vector<8x128xf32>
    %c30 = arith.constant 30 : index
    %123 = memref.load %arg1[%c30] : memref<39xf32, #tpu.memory_space<smem>>
    %124 = vector.broadcast %123 : f32 to vector<8x128xf32>
    %125 = arith.addf %122, %124 : vector<8x128xf32>
    %126 = math.tanh %125 : vector<8x128xf32>
    %c31 = arith.constant 31 : index
    %127 = memref.load %arg1[%c31] : memref<39xf32, #tpu.memory_space<smem>>
    %128 = vector.broadcast %127 : f32 to vector<8x128xf32>
    %129 = arith.mulf %128, %88 : vector<8x128xf32>
    %c33 = arith.constant 33 : index
    %130 = memref.load %arg1[%c33] : memref<39xf32, #tpu.memory_space<smem>>
    %131 = vector.broadcast %130 : f32 to vector<8x128xf32>
    %132 = arith.mulf %131, %107 : vector<8x128xf32>
    %133 = arith.addf %129, %132 : vector<8x128xf32>
    %c35 = arith.constant 35 : index
    %134 = memref.load %arg1[%c35] : memref<39xf32, #tpu.memory_space<smem>>
    %135 = vector.broadcast %134 : f32 to vector<8x128xf32>
    %136 = arith.mulf %135, %126 : vector<8x128xf32>
    %137 = arith.addf %133, %136 : vector<8x128xf32>
    %c37 = arith.constant 37 : index
    %138 = memref.load %arg1[%c37] : memref<39xf32, #tpu.memory_space<smem>>
    %139 = vector.broadcast %138 : f32 to vector<8x128xf32>
    %140 = arith.addf %137, %139 : vector<8x128xf32>
    %141 = math.tanh %140 : vector<8x128xf32>
    %cst_12 = arith.constant 5.000000e-01 : f32
    %142 = vector.broadcast %cst_12 : f32 to vector<8x128xf32>
    %143 = arith.mulf %142, %141 : vector<8x128xf32>
    %cst_13 = arith.constant 5.000000e-01 : f32
    %144 = vector.broadcast %cst_13 : f32 to vector<8x128xf32>
    %145 = arith.addf %143, %144 : vector<8x128xf32>
    %c0_14 = arith.constant 0 : index
    %c0_15 = arith.constant 0 : index
    %c0_16 = arith.constant 0 : index
    %146 = vector.load %arg3[%c0_14, %c0_15, %c0_16] : memref<2x8x128xf32, #tpu.memory_space<vmem>>, vector<1x8x128xf32>
    %147 = vector.shape_cast %146 : vector<1x8x128xf32> to vector<8x128xf32>
    %148 = vector.shape_cast %145 : vector<8x128xf32> to vector<1x8x128xf32>
    tpu.vector_store %arg3[%c0_14, %c0_15, %c0_16], %148 {strides = array<i32>} : memref<2x8x128xf32, #tpu.memory_space<vmem>>, vector<1x8x128xf32>,
    %c32 = arith.constant 32 : index
    %149 = memref.load %arg1[%c32] : memref<39xf32, #tpu.memory_space<smem>>
    %150 = vector.broadcast %149 : f32 to vector<8x128xf32>
    %151 = arith.mulf %150, %88 : vector<8x128xf32>
    %c34 = arith.constant 34 : index
    %152 = memref.load %arg1[%c34] : memref<39xf32, #tpu.memory_space<smem>>
    %153 = vector.broadcast %152 : f32 to vector<8x128xf32>
    %154 = arith.mulf %153, %107 : vector<8x128xf32>
    %155 = arith.addf %151, %154 : vector<8x128xf32>
    %c36 = arith.constant 36 : index
    %156 = memref.load %arg1[%c36] : memref<39xf32, #tpu.memory_space<smem>>
    %157 = vector.broadcast %156 : f32 to vector<8x128xf32>
    %158 = arith.mulf %157, %126 : vector<8x128xf32>
    %159 = arith.addf %155, %158 : vector<8x128xf32>
    %c38 = arith.constant 38 : index
    %160 = memref.load %arg1[%c38] : memref<39xf32, #tpu.memory_space<smem>>
    %161 = vector.broadcast %160 : f32 to vector<8x128xf32>
    %162 = arith.addf %159, %161 : vector<8x128xf32>
    %163 = math.tanh %162 : vector<8x128xf32>
    %cst_17 = arith.constant 5.000000e-01 : f32
    %164 = vector.broadcast %cst_17 : f32 to vector<8x128xf32>
    %165 = arith.mulf %164, %163 : vector<8x128xf32>
    %cst_18 = arith.constant 5.000000e-01 : f32
    %166 = vector.broadcast %cst_18 : f32 to vector<8x128xf32>
    %167 = arith.addf %165, %166 : vector<8x128xf32>
    %c1_19 = arith.constant 1 : index
    %c0_20 = arith.constant 0 : index
    %c0_21 = arith.constant 0 : index
    %168 = vector.load %arg3[%c1_19, %c0_20, %c0_21] : memref<2x8x128xf32, #tpu.memory_space<vmem>>, vector<1x8x128xf32>
    %169 = vector.shape_cast %168 : vector<1x8x128xf32> to vector<8x128xf32>
    %170 = vector.shape_cast %167 : vector<8x128xf32> to vector<1x8x128xf32>
    tpu.vector_store %arg3[%c1_19, %c0_20, %c0_21], %170 {strides = array<i32>} : memref<2x8x128xf32, #tpu.memory_space<vmem>>, vector<1x8x128xf32>,
    return
  }
  func.func @transform_0(%arg0: i32) -> i32 {
    %c0_i32 = arith.constant 0 : i32
    %c0_i32_0 = arith.constant 0 : i32
    return %c0_i32 : i32
  }
  func.func @transform_1(%arg0: i32) -> (i32, i32, i32) {
    %c0_i32 = arith.constant 0 : i32
    %c0_i32_0 = arith.constant 0 : i32
    %c0_i32_1 = arith.constant 0 : i32
    return %c0_i32, %arg0, %c0_i32_0 : i32, i32, i32
  }
  func.func @transform_2(%arg0: i32) -> (i32, i32, i32) {
    %c0_i32 = arith.constant 0 : i32
    %c0_i32_0 = arith.constant 0 : i32
    %c0_i32_1 = arith.constant 0 : i32
    return %c0_i32, %arg0, %c0_i32_0 : i32, i32, i32
  }
}

</mosaic_0001>

<llo_original>
// kernel: custom_net_forward.1
$region0: #{custom_net_forward.1}
  #allocation0 [shape = 'u32[]', space=smem, size = 0x4, offset = 0x4, fixed_abs, tag = 'smem constant byte address 0x4 - core index']
  #allocation1 [shape = 'u32[144,128]{1,0:T(1,128)}', space=vmem, size = 0x12000, scoped, tag = 'internal scratch']
  %s0 = inlined_call_operand.vmem [shape: f32[39], index: 0, kind: input, shape index: {}]
  %s1 = inlined_call_operand.vmem [shape: f32[3,8,128], index: 1, kind: input, shape index: {}]
  %s2 = inlined_call_operand.vmem [shape: f32[2,8,128], index: 2, kind: output, shape index: {}]
  %s3 = sld [smem:[#allocation0]]
  $region22: #{custom_net_forward.1} parent=0
    _
  %s5 = ssub.s32 1, %s3
  %s6 = scalar_select 0, %s5, %s3
  $region1: #{custom_net_forward.1} parent=0
    #allocation2 [shape = 'u8[512]{0}', space=smem, size = 0x200, scoped, tag = 'input window, operand 0, single buffered']
    #allocation3 [shape = 's32[1]{0}', space=sflag, size = 0x4, scoped, tag = 'scoped memory for custom_net_forward.1']
    %7 = vsyncpa [#allocation3], 0
    // Predicated region
    $region2: #{custom_net_forward.1} parent=1 // pred_check
      _
    $region3: #{custom_net_forward.1} parent=1 // pred_check_branch
      %9 = sbr.rel (0) target = $region5
    $region4: #{custom_net_forward.1} parent=1 // pred_region
      %s11 = ssub.s32 16, 16
      %12 = vsyncadd [#allocation3], %s11
      %s14 = sshll.u32 %s0, 4
      %s15 = int_to_ptr.vmem [resolvable:$true] %s14
      %17 = dma.vmem_to_smem %s15, 16, [#allocation2], [#allocation3]
    $region5: #{custom_net_forward.1} parent=1 // pred_fallthru
      _
    // Predicated region
    $region6: #{custom_net_forward.1} parent=1 // pred_check
      _
    $region7: #{custom_net_forward.1} parent=1 // pred_check_branch
      %19 = sbr.rel (0) target = $region9
    $region8: #{custom_net_forward.1} parent=1 // pred_region
      _
    $region9: #{custom_net_forward.1} parent=1 // pred_fallthru
      _
    // Predicated region
    $region10: #{custom_net_forward.1} parent=1 // pred_check
      _
    $region11: #{custom_net_forward.1} parent=1 // pred_check_branch
      %21 = sbr.rel (0) target = $region13
    $region12: #{custom_net_forward.1} parent=1 // pred_region
      %22 = dma.done [#allocation3], 16
    $region13: #{custom_net_forward.1} parent=1 // pred_fallthru
      _
    %23 = sfence
    %v24 = vld [vmem:[%s1] sm:$0xff]
    %s25 = scalar_lea.vmem %s1, 8
    %v26 = vld [vmem:[%s25] sm:$0xff]
    %s27 = scalar_lea.vmem %s1, 16
    %v28 = vld [vmem:[%s27] sm:$0xff]
    %s29 = sld [smem:[#allocation2]]
    %v30 = vstv %s29
    %v31 = vmul.f32 %v30, %v24
    %s32 = sld [smem:[#allocation2 + $0x4]]
    %v33 = vstv %s32
    %v34 = vmul.f32 %v33, %v26
    %v35 = vadd.f32 %v31, %v34
    %s36 = sld [smem:[#allocation2 + $0x8]]
    %v37 = vstv %s36
    %v38 = vmul.f32 %v37, %v28
    %v39 = vadd.f32 %v35, %v38
    %s40 = sld [smem:[#allocation2 + $0xc]]
    %v41 = vstv %s40
    %v42 = vadd.f32 %v39, %v41
    %v43 = vmax.f32 %v42, 0.0
    %s44 = sld [smem:[#allocation2 + $0x1]]
    %v45 = vstv %s44
    %v46 = vmul.f32 %v45, %v24
    %s47 = sld [smem:[#allocation2 + $0x5]]
    %v48 = vstv %s47
    %v49 = vmul.f32 %v48, %v26
    %v50 = vadd.f32 %v46, %v49
    %s51 = sld [smem:[#allocation2 + $0x9]]
    %v52 = vstv %s51
    %v53 = vmul.f32 %v52, %v28
    %v54 = vadd.f32 %v50, %v53
    %s55 = sld [smem:[#allocation2 + $0xd]]
    %v56 = vstv %s55
    %v57 = vadd.f32 %v54, %v56
    %v58 = vmax.f32 %v57, 0.0
    %s59 = sld [smem:[#allocation2 + $0x2]]
    %v60 = vstv %s59
    %v61 = vmul.f32 %v60, %v24
    %s62 = sld [smem:[#allocation2 + $0x6]]
    %v63 = vstv %s62
    %v64 = vmul.f32 %v63, %v26
    %v65 = vadd.f32 %v61, %v64
    %s66 = sld [smem:[#allocation2 + $0xa]]
    %v67 = vstv %s66
    %v68 = vmul.f32 %v67, %v28
    %v69 = vadd.f32 %v65, %v68
    %s70 = sld [smem:[#allocation2 + $0xe]]
    %v71 = vstv %s70
    %v72 = vadd.f32 %v69, %v71
    %v73 = vmax.f32 %v72, 0.0
    %s74 = sld [smem:[#allocation2 + $0x3]]
    %v75 = vstv %s74
    %v76 = vmul.f32 %v75, %v24
    %s77 = sld [smem:[#allocation2 + $0x7]]
    %v78 = vstv %s77
    %v79 = vmul.f32 %v78, %v26
    %v80 = vadd.f32 %v76, %v79
    %s81 = sld [smem:[#allocation2 + $0xb]]
    %v82 = vstv %s81
    %v83 = vmul.f32 %v82, %v28
    %v84 = vadd.f32 %v80, %v83
    %s85 = sld [smem:[#allocation2 + $0xf]]
    %v86 = vstv %s85
    %v87 = vadd.f32 %v84, %v86
    %v88 = vmax.f32 %v87, 0.0
    %s89 = sld [smem:[#allocation2 + $0x10]]
    %v90 = vstv %s89
    %v91 = vmul.f32 %v90, %v43
    %s92 = sld [smem:[#allocation2 + $0x13]]
    %v93 = vstv %s92
    %v94 = vmul.f32 %v93, %v58
    %v95 = vadd.f32 %v91, %v94
    %s96 = sld [smem:[#allocation2 + $0x16]]
    %v97 = vstv %s96
    %v98 = vmul.f32 %v97, %v73
    %v99 = vadd.f32 %v95, %v98
    %s100 = sld [smem:[#allocation2 + $0x19]]
    %v101 = vstv %s100
    %v102 = vmul.f32 %v101, %v88
    %v103 = vadd.f32 %v99, %v102
    %s104 = sld [smem:[#allocation2 + $0x1c]]
    %v105 = vstv %s104
    %v106 = vadd.f32 %v103, %v105
    %v107 = vtanh.pop %v106
    %s108 = sld [smem:[#allocation2 + $0x11]]
    %v109 = vstv %s108
    %v110 = vmul.f32 %v109, %v43
    %s111 = sld [smem:[#allocation2 + $0x14]]
    %v112 = vstv %s111
    %v113 = vmul.f32 %v112, %v58
    %v114 = vadd.f32 %v110, %v113
    %s115 = sld [smem:[#allocation2 + $0x17]]
    %v116 = vstv %s115
    %v117 = vmul.f32 %v116, %v73
    %v118 = vadd.f32 %v114, %v117
    %s119 = sld [smem:[#allocation2 + $0x1a]]
    %v120 = vstv %s119
    %v121 = vmul.f32 %v120, %v88
    %v122 = vadd.f32 %v118, %v121
    %s123 = sld [smem:[#allocation2 + $0x1d]]
    %v124 = vstv %s123
    %v125 = vadd.f32 %v122, %v124
    %v126 = vtanh.pop %v125
    %s127 = sld [smem:[#allocation2 + $0x12]]
    %v128 = vstv %s127
    %v129 = vmul.f32 %v128, %v43
    %s130 = sld [smem:[#allocation2 + $0x15]]
    %v131 = vstv %s130
    %v132 = vmul.f32 %v131, %v58
    %v133 = vadd.f32 %v129, %v132
    %s134 = sld [smem:[#allocation2 + $0x18]]
    %v135 = vstv %s134
    %v136 = vmul.f32 %v135, %v73
    %v137 = vadd.f32 %v133, %v136
    %s138 = sld [smem:[#allocation2 + $0x1b]]
    %v139 = vstv %s138
    %v140 = vmul.f32 %v139, %v88
    %v141 = vadd.f32 %v137, %v140
    %s142 = sld [smem:[#allocation2 + $0x1e]]
    %v143 = vstv %s142
    %v144 = vadd.f32 %v141, %v143
    %v145 = vtanh.pop %v144
    %s146 = sld [smem:[#allocation2 + $0x1f]]
    %v147 = vstv %s146
    %v148 = vmul.f32 %v147, %v107
    %s149 = sld [smem:[#allocation2 + $0x21]]
    %v150 = vstv %s149
    %v151 = vmul.f32 %v150, %v126
    %v152 = vadd.f32 %v148, %v151
    %s153 = sld [smem:[#allocation2 + $0x23]]
    %v154 = vstv %s153
    %v155 = vmul.f32 %v154, %v145
    %v156 = vadd.f32 %v152, %v155
    %s157 = sld [smem:[#allocation2 + $0x25]]
    %v158 = vstv %s157
    %v159 = vadd.f32 %v156, %v158
    %v160 = vtanh.pop %v159
    %v161 = vmul.f32 %v160, 0.5
    %v162 = vadd.f32 %v161, 0.5
    %163 = vst [vmem:[%s2] sm:$0xff] %v162
    %s164 = sld [smem:[#allocation2 + $0x20]]
    %v165 = vstv %s164
    %v166 = vmul.f32 %v165, %v107
    %s167 = sld [smem:[#allocation2 + $0x22]]
    %v168 = vstv %s167
    %v169 = vmul.f32 %v168, %v126
    %v170 = vadd.f32 %v166, %v169
    %s171 = sld [smem:[#allocation2 + $0x24]]
    %v172 = vstv %s171
    %v173 = vmul.f32 %v172, %v145
    %v174 = vadd.f32 %v170, %v173
    %s175 = sld [smem:[#allocation2 + $0x26]]
    %v176 = vstv %s175
    %v177 = vadd.f32 %v174, %v176
    %v178 = vtanh.pop %v177
    %v179 = vmul.f32 %v178, 0.5
    %v180 = vadd.f32 %v179, 0.5
    %s181 = scalar_lea.vmem %s2, 8
    %182 = vst [vmem:[%s181] sm:$0xff] %v180
    // Predicated region
    $region14: #{custom_net_forward.1} parent=1 // pred_check
      _
    $region15: #{custom_net_forward.1} parent=1 // pred_check_branch
      %184 = sbr.rel (0) target = $region17
    $region16: #{custom_net_forward.1} parent=1 // pred_region
      _
    $region17: #{custom_net_forward.1} parent=1 // pred_fallthru
      _
    // Predicated region
    $region18: #{custom_net_forward.1} parent=1 // pred_check
      _
    $region19: #{custom_net_forward.1} parent=1 // pred_check_branch
      %186 = sbr.rel (0) target = $region21
    $region20: #{custom_net_forward.1} parent=1 // pred_region
      _
    $region21: #{custom_net_forward.1} parent=1 // pred_fallthru
      _
    %187 = vsyncpa [#allocation3], 1

</llo_original>
